<compile_context>
chip_gen: v6e
topology: v6e:2x2x1
jax: 0.10.0
libtpu: 0.0.40
codegen_flags: <defaults>
</compile_context>

<pallas_src>
import math
import functools

import jax
import jax.numpy as jnp
from jax import lax
from jax.experimental import pallas as pl
from jax.experimental.pallas import tpu as pltpu


NEG_BIG = -1e37   # far below any reachable att row max (mask bias is -1e30)
_MIB = 1024 * 1024


def _round_up(x, m):
    return ((x + m - 1) // m) * m


def _vmem_capacity_bytes():
    """Per-core VMEM capacity; conservative 64 MiB (v7x-class) fallback."""
    try:
        info = pltpu.get_tpu_info()
        for name in ("vmem_capacity_bytes", "vmem_size_bytes", "vmem_bytes"):
            v = getattr(info, name, None)
            if isinstance(v, int) and v > 0:
                return v
    except Exception:
        pass
    return 64 * _MIB


def _estimate_vmem(tli, Lm, H, out_bytes):
    """Rough double-buffered working-set estimate for the main kernel (bytes)."""
    lane_h = _round_up(H, 128)
    lane_lm = _round_up(Lm, 128)
    sub_lm = _round_up(Lm, 8)
    need = 2 * sub_lm * lane_h * 2                       # resident memory block (bf16)
    need += 2 * 8 * lane_lm * 4                          # (1,1,Lm) bias block (f32)
    need += 2 * tli * lane_h * 4                         # inp tile (f32)
    need += 2 * tli * _round_up(4 * H, 128) * out_bytes  # out tile
    need += 3 * tli * lane_lm * 4                        # att / p temporaries
    need += 4 * 8 * lane_h * 4                           # o2 block + f32 scratch
    return need


def _choose_tli(Li, Lm, H, tli_max, out_bytes, budget):
    cap = max(8, min(_round_up(tli_max, 8), _round_up(Li, 8)))
    tli = cap
    while tli > 8 and _estimate_vmem(tli, Lm, H, out_bytes) > budget:
        tli = max(8, ((tli // 2) // 8) * 8)
    return tli


@functools.partial(jax.jit, static_argnames=("tli_max", "out_dtype", "exp_dtype"))
def bi_attention(inp, mem, mask, w_in, w_mem, dot_scale, *,
                 tli_max=256, out_dtype=jnp.float32, exp_dtype=jnp.float32):
    """Pallas BiAttention forward (eval mode).

    inp (B,Li,H), mem (B,Lm,H), mask (B,Lm) in {0,1}.
    out_dtype=bfloat16 halves the dominant HBM write (v5e) if downstream tolerates.
    exp_dtype=bfloat16 enables the bf16 EUP exp path (v6e/v7x only).
    """
    f32 = jnp.float32
    mxu_dtype = jnp.bfloat16
    B, Li, H = inp.shape
    _, Lm, _ = mem.shape
    assert tli_max % 8 == 0

    inp32 = inp.astype(f32)
    mem_mx = mem.astype(mxu_dtype)                        # MXU operand (resident)
    w_in2 = w_in.reshape(1, H).astype(f32)
    scale2 = dot_scale.reshape(1, H).astype(f32)

    # memory_linear (no bias) + additive mask bias, precomputed once (O(B*Lm*H)).
    bias = (jnp.einsum('bmd,d->bm', mem.astype(f32), w_mem.astype(f32))
            + (mask.astype(f32) - 1.0) * 1e30)[:, None, :]            # (B,1,Lm) f32

    # ---- tiling / VMEM budget (derived from the actual chip) ----------------
    out_bytes = jnp.dtype(out_dtype).itemsize
    vmem_cap = _vmem_capacity_bytes()
    vmem_limit = max(32 * _MIB, vmem_cap - 16 * _MIB)
    budget = max(16 * _MIB, vmem_cap - 32 * _MIB)
    tli = _choose_tli(Li, Lm, H, tli_max, out_bytes, budget)
    n_li = pl.cdiv(Li, tli)
    ragged = (Li % tli) != 0
    lane_aligned = (H % 128 == 0)

    # ---- main kernel: att once, o1, segments 0..2, streaming o2 accumulator --
    def main_kernel(inp_ref, mem_ref, bias_ref, w_in_ref, scale_ref,
                    out_ref, o2_ref, m_sc, s_sc, acc_sc):
        li = pl.program_id(1)

        @pl.when(li == 0)
        def _init():
            m_sc[...] = jnp.full((1, 1), NEG_BIG, f32)
            s_sc[...] = jnp.zeros((1, 1), f32)
            acc_sc[...] = jnp.zeros((1, H), f32)

        x = inp_ref[0]                       # (tli,H) f32; rows >= Li of the last tile = garbage
        mem_t = mem_ref[0]                   # (Lm,H) bf16 (resident per batch)

        # att = (x*scale) @ mem^T + <x, w_in> + (mem_linear + mask bias)
        input_dot = jnp.sum(x * w_in_ref[...], axis=-1, keepdims=True)   # (tli,1) VPU
        x_mx = (x * scale_ref[...]).astype(mem_t.dtype)
        cross = lax.dot_general(x_mx, mem_t, (((1,), (1,)), ((), ())),
                                preferred_element_type=f32)              # (tli,Lm) MXU
        att = cross + input_dot + bias_ref[0]                            # (tli,Lm)

        # softmax over Lm -> output_one (row-local; garbage rows never leak)
        m1 = jnp.max(att, axis=-1, keepdims=True)                        # (tli,1)
        if exp_dtype == f32:
            p = jnp.exp(att - m1)
            l1 = jnp.sum(p, axis=-1, keepdims=True)
        else:  # bf16 EUP path (v6e/v7x); keep the row-sum in f32
            p = jnp.exp((att - m1).astype(exp_dtype))
            l1 = jnp.sum(p.astype(f32), axis=-1, keepdims=True)
        o1 = lax.dot_general(p.astype(mem_t.dtype), mem_t,
                             (((1,), (0,)), ((), ())),
                             preferred_element_type=f32)                 # (tli,H) MXU
        o1 = o1 * pl.reciprocal(l1, approx=True)

        # online softmax over Li of the att row maxes -> output_two accumulator
        am = m1
        x_acc = x
        if ragged:
            row = li * tli + lax.broadcasted_iota(jnp.int32, (tli, 1), 0)
            valid = row < Li
            am = jnp.where(valid, am, NEG_BIG)     # padded rows -> weight exactly 0
            x_acc = jnp.where(valid, x, 0.0)       # never multiply garbage / NaN
        m_new = jnp.maximum(m_sc[...], jnp.max(am, axis=0, keepdims=True))   # (1,1)
        alpha = jnp.exp(m_sc[...] - m_new)
        p2 = jnp.exp(am - m_new)                                             # (tli,1)
        s_sc[...] = alpha * s_sc[...] + jnp.sum(p2, axis=0, keepdims=True)
        acc_sc[...] = alpha * acc_sc[...] + jnp.sum(p2 * x_acc, axis=0, keepdims=True)
        m_sc[...] = m_new

        @pl.when(li == pl.num_programs(1) - 1)
        def _finalize():
            o2_ref[0] = acc_sc[...] * pl.reciprocal(s_sc[...], approx=True)

        # store segments 0..2 (lane offsets 0,H,2H are 128-aligned when H%128==0);
        # segment 3 (= o2*o1) is written by the follow-up pass.
        od = out_ref.dtype
        out_ref[0, :, 0 * H:1 * H] = x.astype(od)
        out_ref[0, :, 1 * H:2 * H] = o1.astype(od)
        out_ref[0, :, 2 * H:3 * H] = (x * o1).astype(od)

    out_main, o2 = pl.pallas_call(
        main_kernel,
        out_shape=(jax.ShapeDtypeStruct((B, Li, 4 * H), out_dtype),
                   jax.ShapeDtypeStruct((B, 1, H), f32)),
        grid_spec=pltpu.PrefetchScalarGridSpec(
            num_scalar_prefetch=0,
            grid=(B, n_li),
            in_specs=[
                pl.BlockSpec((1, tli, H), lambda b, l: (b, l, 0)),
                pl.BlockSpec((1, Lm, H), lambda b, l: (b, 0, 0)),    # resident per batch
                pl.BlockSpec((1, 1, Lm), lambda b, l: (b, 0, 0)),
                pl.BlockSpec((1, H), lambda b, l: (0, 0)),
                pl.BlockSpec((1, H), lambda b, l: (0, 0)),
            ],
            out_specs=(pl.BlockSpec((1, tli, 4 * H), lambda b, l: (b, l, 0)),
                       pl.BlockSpec((1, 1, H), lambda b, l: (b, 0, 0))),
            scratch_shapes=[pltpu.VMEM((1, 1), f32),    # m (o2 running max)
                            pltpu.VMEM((1, 1), f32),    # s (o2 running denom)
                            pltpu.VMEM((1, H), f32)],   # acc (o2 running numerator)
        ),
        compiler_params=pltpu.CompilerParams(
            # Li carries the output_two accumulator -> "arbitrary";
            # batch axis shards across TensorCores (megacore).
            dimension_semantics=("parallel", "arbitrary"),
            vmem_limit_bytes=vmem_limit),
    )(inp32, mem_mx, bias, w_in2, scale2)

    # ---- follow-up: segment 3 = o2 * o1 --------------------------------------
    if lane_aligned:
        # Aliased Pallas pass: reads only the H-wide o1 lane-block, writes only
        # the H-wide segment-4 lane-block (dense, aligned stores; the rest of the
        # aliased buffer is untouched).
        def seg4_kernel(o1_ref, o2_ref, seg4_ref):
            seg4_ref[0] = (o2_ref[0] * o1_ref[0].astype(f32)).astype(seg4_ref.dtype)

        out = pl.pallas_call(
            seg4_kernel,
            out_shape=jax.ShapeDtypeStruct((B, Li, 4 * H), out_dtype),
            grid_spec=pltpu.PrefetchScalarGridSpec(
                num_scalar_prefetch=0,
                grid=(B, n_li),
                in_specs=[
                    pl.BlockSpec((1, tli, H), lambda b, l: (b, l, 1)),   # o1 segment
                    pl.BlockSpec((1, 1, H), lambda b, l: (b, 0, 0)),     # o2
                ],
                out_specs=pl.BlockSpec((1, tli, H), lambda b, l: (b, l, 3)),
            ),
            input_output_aliases={0: 0},
            compiler_params=pltpu.CompilerParams(
                dimension_semantics=("parallel", "parallel"),
                vmem_limit_bytes=vmem_limit),
        )(out_main, o2)
    else:
        # Small-H fallback: fused elementwise update in XLA.
        o1 = out_main[:, :, H:2 * H].astype(f32)
        out = out_main.at[:, :, 3 * H:4 * H].set((o2 * o1).astype(out_dtype))

    return out


def bi_attention_ref(inp, mem, mask, w_in, w_mem, scale, mxu_dtype=jnp.float32):
    """Pure-JAX reference mirroring the PyTorch forward (eval mode).

    mxu_dtype=bfloat16 mirrors the kernel's MXU-operand casts (f32 accumulation)."""
    f32 = jnp.float32
    inp = inp.astype(f32)
    mem = mem.astype(f32)
    input_dot = jnp.sum(inp * w_in, axis=-1, keepdims=True)              # (B,Li,1)
    memory_dot = jnp.sum(mem * w_mem, axis=-1)[:, None, :]               # (B,1,Lm)
    cross = jnp.einsum('bld,bmd->blm', (inp * scale).astype(mxu_dtype),
                       mem.astype(mxu_dtype), preferred_element_type=f32)
    att = input_dot + memory_dot + cross - 1e30 * (1.0 - mask.astype(f32)[:, None, :])
    w1 = jax.nn.softmax(att, axis=-1)
    o1 = jnp.einsum('blm,bmd->bld', w1.astype(mxu_dtype), mem.astype(mxu_dtype),
                    preferred_element_type=f32)
    w2 = jax.nn.softmax(jnp.max(att, axis=-1), axis=-1)[:, None, :]      # (B,1,Li)
    o2 = jnp.einsum('blk,bkd->bld', w2, inp)                             # (B,1,H)
    return jnp.concatenate([inp, o1, inp * o1, o2 * o1], axis=-1)


def _make_inputs(key, B, Li, Lm, H):
    k_inp, k_mem, k_mask, k_win, k_wmem, k_scale = jax.random.split(key, 6)
    inp = jax.random.normal(k_inp, (B, Li, H), dtype=jnp.float32)
    mem = jax.random.normal(k_mem, (B, Lm, H), dtype=jnp.float32)
    mask = (jax.random.uniform(k_mask, (B, Lm)) > 0.3).astype(jnp.float32)
    bound = 1.0 / math.sqrt(H)
    w_in = jax.random.uniform(k_win, (H,), minval=-bound, maxval=bound,
                              dtype=jnp.float32)
    w_mem = jax.random.uniform(k_wmem, (H,), minval=-bound, maxval=bound,
                               dtype=jnp.float32)
    dot_scale = jax.random.uniform(k_scale, (H,), minval=bound, maxval=1.0,
                                   dtype=jnp.float32)
    return inp, mem, mask, w_in, w_mem, dot_scale


if __name__ == "__main__":
    # Test 1: small non-128-aligned H (fallback store path), single Li tile.
    B, Li, Lm, H = 2, 8, 16, 32
    args = _make_inputs(jax.random.PRNGKey(0), B, Li, Lm, H)
    out = jax.block_until_ready(bi_attention(*args))
    assert out.shape == (B, Li, 4 * H)
    ref_m = bi_attention_ref(*args, mxu_dtype=jnp.bfloat16)   # same MXU casts
    ref_f = bi_attention_ref(*args)                           # pure f32 module
    assert jnp.allclose(out, ref_m, atol=1e-2, rtol=1e-2), \
        "mismatch vs bf16-matched reference"
    assert jnp.allclose(out, ref_f, atol=2.5e-1, rtol=2.5e-1), \
        "gross mismatch vs f32 reference"

    # Test 2: ragged Li (partial last block, no padding copies) + cross-tile
    # output_two accumulator: Li=20, tli=8 -> 3 tiles, 4 masked rows.
    B2, Li2, Lm2, H2 = 2, 20, 16, 32
    args2 = _make_inputs(jax.random.PRNGKey(1), B2, Li2, Lm2, H2)
    out2 = jax.block_until_ready(bi_attention(*args2, tli_max=8))
    assert out2.shape == (B2, Li2, 4 * H2)
    ref2 = bi_attention_ref(*args2, mxu_dtype=jnp.bfloat16)
    assert jnp.allclose(out2, ref2, atol=1e-2, rtol=1e-2), \
        "ragged-Li mismatch vs reference"

    # Test 3: 128-aligned H -> dense lane-aligned stores + aliased segment-4 pass.
    B3, Li3, Lm3, H3 = 2, 24, 16, 128
    args3 = _make_inputs(jax.random.PRNGKey(2), B3, Li3, Lm3, H3)
    out3 = jax.block_until_ready(bi_attention(*args3, tli_max=16))
    assert out3.shape == (B3, Li3, 4 * H3)
    ref3 = bi_attention_ref(*args3, mxu_dtype=jnp.bfloat16)
    assert jnp.allclose(out3, ref3, atol=1e-2, rtol=1e-2), \
        "aligned-path mismatch vs reference"

    # Test 4: bf16 EUP exp option (v6e/v7x) — looser tolerance for bf16 exp.
    out4 = jax.block_until_ready(bi_attention(*args, exp_dtype=jnp.bfloat16))
    assert jnp.allclose(out4, ref_m, atol=5e-2, rtol=5e-2), \
        "bf16-exp path mismatch vs reference"

    print("KERNEL_OK")
</pallas_src>

<mosaic_0001>
module attributes {stable_mosaic.version = 11 : i64} {
  func.func @main_kernel(%arg0: i32, %arg1: i32, %arg2: memref<1x8x32xf32, #tpu.memory_space<vmem>>, %arg3: memref<1x16x32xbf16, #tpu.memory_space<vmem>>, %arg4: memref<1x1x16xf32, #tpu.memory_space<vmem>>, %arg5: memref<1x32xf32, #tpu.memory_space<vmem>>, %arg6: memref<1x32xf32, #tpu.memory_space<vmem>>, %arg7: memref<1x8x128xf32, #tpu.memory_space<vmem>>, %arg8: memref<1x1x32xf32, #tpu.memory_space<vmem>>, %arg9: memref<1x1xf32, #tpu.memory_space<vmem>>, %arg10: memref<1x1xf32, #tpu.memory_space<vmem>>, %arg11: memref<1x32xf32, #tpu.memory_space<vmem>>) attributes {dimension_semantics = [#tpu.dimension_semantics<parallel>, #tpu.dimension_semantics<arbitrary>], iteration_bounds = array<i64: 2, 1>, scalar_prefetch = 0 : i64, scratch_operands = 3 : i64, tpu.core_type = #tpu.core_type<tc>, window_params = [{transform_indices = @transform_0, window_bounds = array<i64: 1, 8, 32>}, {transform_indices = @transform_1, window_bounds = array<i64: 1, 16, 32>}, {transform_indices = @transform_2, window_bounds = array<i64: 1, 1, 16>}, {pipeline_mode = #tpu.pipeline_mode<synchronous>, transform_indices = @transform_3, window_bounds = array<i64: 1, 32>}, {pipeline_mode = #tpu.pipeline_mode<synchronous>, transform_indices = @transform_4, window_bounds = array<i64: 1, 32>}, {transform_indices = @transform_5, window_bounds = array<i64: 1, 8, 128>}, {transform_indices = @transform_6, window_bounds = array<i64: 1, 1, 32>}]} {
    %c0_i32 = arith.constant 0 : i32
    %0 = arith.cmpi eq, %arg1, %c0_i32 : i32
    %1 = arith.extui %0 : i1 to i32
    %c0_i32_0 = arith.constant 0 : i32
    %2 = arith.cmpi ne, %1, %c0_i32_0 : i32
    scf.if %2 {
      %cst_43 = arith.constant -9.99999993E+36 : f32
      %74 = vector.broadcast %cst_43 : f32 to vector<1x1xf32>
      %c0_44 = arith.constant 0 : index
      %c0_45 = arith.constant 0 : index
      %75 = vector.load %arg9[%c0_44, %c0_45] : memref<1x1xf32, #tpu.memory_space<vmem>>, vector<1x1xf32>
      tpu.vector_store %arg9[%c0_44, %c0_45], %74 {strides = array<i32>} : memref<1x1xf32, #tpu.memory_space<vmem>>, vector<1x1xf32>,
      %cst_46 = arith.constant 0.000000e+00 : f32
      %76 = vector.broadcast %cst_46 : f32 to vector<1x1xf32>
      %c0_47 = arith.constant 0 : index
      %c0_48 = arith.constant 0 : index
      %77 = vector.load %arg10[%c0_47, %c0_48] : memref<1x1xf32, #tpu.memory_space<vmem>>, vector<1x1xf32>
      tpu.vector_store %arg10[%c0_47, %c0_48], %76 {strides = array<i32>} : memref<1x1xf32, #tpu.memory_space<vmem>>, vector<1x1xf32>,
      %cst_49 = arith.constant 0.000000e+00 : f32
      %78 = vector.broadcast %cst_49 : f32 to vector<1x32xf32>
      %c0_50 = arith.constant 0 : index
      %c0_51 = arith.constant 0 : index
      %79 = vector.load %arg11[%c0_50, %c0_51] : memref<1x32xf32, #tpu.memory_space<vmem>>, vector<1x32xf32>
      tpu.vector_store %arg11[%c0_50, %c0_51], %78 {strides = array<i32>} : memref<1x32xf32, #tpu.memory_space<vmem>>, vector<1x32xf32>,
    } else {
    }
    %c0 = arith.constant 0 : index
    %c0_1 = arith.constant 0 : index
    %c0_2 = arith.constant 0 : index
    %3 = vector.load %arg2[%c0, %c0_1, %c0_2] : memref<1x8x32xf32, #tpu.memory_space<vmem>>, vector<1x8x32xf32>
    %4 = vector.shape_cast %3 : vector<1x8x32xf32> to vector<8x32xf32>
    %c0_3 = arith.constant 0 : index
    %c0_4 = arith.constant 0 : index
    %c0_5 = arith.constant 0 : index
    %5 = vector.load %arg3[%c0_3, %c0_4, %c0_5] : memref<1x16x32xbf16, #tpu.memory_space<vmem>>, vector<1x16x32xbf16>
    %6 = vector.shape_cast %5 : vector<1x16x32xbf16> to vector<16x32xbf16>
    %c0_6 = arith.constant 0 : index
    %c0_7 = arith.constant 0 : index
    %7 = vector.load %arg5[%c0_6, %c0_7] : memref<1x32xf32, #tpu.memory_space<vmem>>, vector<1x32xf32>
    %8 = vector.broadcast %7 : vector<1x32xf32> to vector<8x32xf32>
    %9 = arith.mulf %4, %8 : vector<8x32xf32>
    %cst = arith.constant dense<0.000000e+00> : vector<8xf32>
    %10 = vector.multi_reduction <add>, %9, %cst [1] : vector<8x32xf32> to vector<8xf32>
    %11 = vector.shape_cast %10 : vector<8xf32> to vector<8x1xf32>
    %c0_8 = arith.constant 0 : index
    %c0_9 = arith.constant 0 : index
    %12 = vector.load %arg6[%c0_8, %c0_9] : memref<1x32xf32, #tpu.memory_space<vmem>>, vector<1x32xf32>
    %13 = vector.broadcast %12 : vector<1x32xf32> to vector<8x32xf32>
    %14 = arith.mulf %4, %13 : vector<8x32xf32>
    %15 = arith.truncf %14 : vector<8x32xf32> to vector<8x32xbf16>
    %cst_10 = arith.constant dense<0.000000e+00> : vector<8x16xf32>
    %16 = tpu.matmul %15, %6, %cst_10 {dimension_numbers = #tpu.dot_dimension_numbers<[1], [1], [0], [0], [0, 0, 1, 0], [], []>} : vector<8x32xbf16>, vector<16x32xbf16>, vector<8x16xf32> -> vector<8x16xf32>
    %17 = vector.broadcast %11 : vector<8x1xf32> to vector<8x16xf32>
    %18 = arith.addf %16, %17 : vector<8x16xf32>
    %c0_11 = arith.constant 0 : index
    %c0_12 = arith.constant 0 : index
    %c0_13 = arith.constant 0 : index
    %19 = vector.load %arg4[%c0_11, %c0_12, %c0_13] : memref<1x1x16xf32, #tpu.memory_space<vmem>>, vector<1x1x16xf32>
    %20 = vector.shape_cast %19 : vector<1x1x16xf32> to vector<1x16xf32>
    %21 = vector.broadcast %20 : vector<1x16xf32> to vector<8x16xf32>
    %22 = arith.addf %18, %21 : vector<8x16xf32>
    %cst_14 = arith.constant dense<0xFF800000> : vector<8xf32>
    %23 = vector.multi_reduction <maximumf>, %22, %cst_14 [1] : vector<8x16xf32> to vector<8xf32>
    %24 = vector.shape_cast %23 : vector<8xf32> to vector<8x1xf32>
    %25 = vector.broadcast %24 : vector<8x1xf32> to vector<8x16xf32>
    %26 = arith.subf %22, %25 : vector<8x16xf32>
    %27 = math.exp %26 : vector<8x16xf32>
    %cst_15 = arith.constant dense<0.000000e+00> : vector<8xf32>
    %28 = vector.multi_reduction <add>, %27, %cst_15 [1] : vector<8x16xf32> to vector<8xf32>
    %29 = vector.shape_cast %28 : vector<8xf32> to vector<8x1xf32>
    %30 = arith.truncf %27 : vector<8x16xf32> to vector<8x16xbf16>
    %cst_16 = arith.constant dense<0.000000e+00> : vector<8x32xf32>
    %31 = tpu.matmul %30, %6, %cst_16 {dimension_numbers = #tpu.dot_dimension_numbers<[1], [0], [0], [1], [0, 0, 1, 1], [], []>} : vector<8x16xbf16>, vector<16x32xbf16>, vector<8x32xf32> -> vector<8x32xf32>
    %32 = tpu.reciprocal %29 {approx = true} : vector<8x1xf32> -> vector<8x1xf32>
    %33 = vector.broadcast %32 : vector<8x1xf32> to vector<8x32xf32>
    %34 = arith.mulf %31, %33 : vector<8x32xf32>
    %c0_17 = arith.constant 0 : index
    %c0_18 = arith.constant 0 : index
    %35 = vector.load %arg9[%c0_17, %c0_18] : memref<1x1xf32, #tpu.memory_space<vmem>>, vector<1x1xf32>
    %cst_19 = arith.constant dense<0xFF800000> : vector<1xf32>
    %36 = vector.multi_reduction <maximumf>, %24, %cst_19 [0] : vector<8x1xf32> to vector<1xf32>
    %37 = vector.shape_cast %36 : vector<1xf32> to vector<1x1xf32>
    %38 = arith.maximumf %35, %37 : vector<1x1xf32>
    %c0_20 = arith.constant 0 : index
    %c0_21 = arith.constant 0 : index
    %39 = vector.load %arg9[%c0_20, %c0_21] : memref<1x1xf32, #tpu.memory_space<vmem>>, vector<1x1xf32>
    %40 = arith.subf %39, %38 : vector<1x1xf32>
    %41 = math.exp %40 : vector<1x1xf32>
    %42 = vector.broadcast %38 : vector<1x1xf32> to vector<8x1xf32>
    %43 = arith.subf %24, %42 : vector<8x1xf32>
    %44 = math.exp %43 : vector<8x1xf32>
    %c0_22 = arith.constant 0 : index
    %c0_23 = arith.constant 0 : index
    %45 = vector.load %arg10[%c0_22, %c0_23] : memref<1x1xf32, #tpu.memory_space<vmem>>, vector<1x1xf32>
    %46 = arith.mulf %41, %45 : vector<1x1xf32>
    %cst_24 = arith.constant dense<0.000000e+00> : vector<1xf32>
    %47 = vector.multi_reduction <add>, %44, %cst_24 [0] : vector<8x1xf32> to vector<1xf32>
    %48 = vector.shape_cast %47 : vector<1xf32> to vector<1x1xf32>
    %49 = arith.addf %46, %48 : vector<1x1xf32>
    %c0_25 = arith.constant 0 : index
    %c0_26 = arith.constant 0 : index
    %50 = vector.load %arg10[%c0_25, %c0_26] : memref<1x1xf32, #tpu.memory_space<vmem>>, vector<1x1xf32>
    tpu.vector_store %arg10[%c0_25, %c0_26], %49 {strides = array<i32>} : memref<1x1xf32, #tpu.memory_space<vmem>>, vector<1x1xf32>,
    %c0_27 = arith.constant 0 : index
    %c0_28 = arith.constant 0 : index
    %51 = vector.load %arg11[%c0_27, %c0_28] : memref<1x32xf32, #tpu.memory_space<vmem>>, vector<1x32xf32>
    %52 = vector.broadcast %41 : vector<1x1xf32> to vector<1x32xf32>
    %53 = arith.mulf %52, %51 : vector<1x32xf32>
    %54 = vector.broadcast %44 : vector<8x1xf32> to vector<8x32xf32>
    %55 = arith.mulf %54, %4 : vector<8x32xf32>
    %cst_29 = arith.constant dense<0.000000e+00> : vector<32xf32>
    %56 = vector.multi_reduction <add>, %55, %cst_29 [0] : vector<8x32xf32> to vector<32xf32>
    %57 = vector.shape_cast %56 : vector<32xf32> to vector<1x32xf32>
    %58 = arith.addf %53, %57 : vector<1x32xf32>
    %c0_30 = arith.constant 0 : index
    %c0_31 = arith.constant 0 : index
    %59 = vector.load %arg11[%c0_30, %c0_31] : memref<1x32xf32, #tpu.memory_space<vmem>>, vector<1x32xf32>
    tpu.vector_store %arg11[%c0_30, %c0_31], %58 {strides = array<i32>} : memref<1x32xf32, #tpu.memory_space<vmem>>, vector<1x32xf32>,
    %c0_32 = arith.constant 0 : index
    %c0_33 = arith.constant 0 : index
    %60 = vector.load %arg9[%c0_32, %c0_33] : memref<1x1xf32, #tpu.memory_space<vmem>>, vector<1x1xf32>
    tpu.vector_store %arg9[%c0_32, %c0_33], %38 {strides = array<i32>} : memref<1x1xf32, #tpu.memory_space<vmem>>, vector<1x1xf32>,
    %c0_i32_34 = arith.constant 0 : i32
    %61 = arith.cmpi eq, %arg1, %c0_i32_34 : i32
    %62 = arith.extui %61 : i1 to i32
    %c0_i32_35 = arith.constant 0 : i32
    %63 = arith.cmpi ne, %62, %c0_i32_35 : i32
    scf.if %63 {
      %c0_43 = arith.constant 0 : index
      %c0_44 = arith.constant 0 : index
      %74 = vector.load %arg11[%c0_43, %c0_44] : memref<1x32xf32, #tpu.memory_space<vmem>>, vector<1x32xf32>
      %c0_45 = arith.constant 0 : index
      %c0_46 = arith.constant 0 : index
      %75 = vector.load %arg10[%c0_45, %c0_46] : memref<1x1xf32, #tpu.memory_space<vmem>>, vector<1x1xf32>
      %76 = tpu.reciprocal %75 {approx = true} : vector<1x1xf32> -> vector<1x1xf32>
      %77 = vector.broadcast %76 : vector<1x1xf32> to vector<1x32xf32>
      %78 = arith.mulf %74, %77 : vector<1x32xf32>
      %c0_47 = arith.constant 0 : index
      %c0_48 = arith.constant 0 : index
      %c0_49 = arith.constant 0 : index
      %79 = vector.load %arg8[%c0_47, %c0_48, %c0_49] : memref<1x1x32xf32, #tpu.memory_space<vmem>>, vector<1x1x32xf32>
      %80 = vector.shape_cast %79 : vector<1x1x32xf32> to vector<1x32xf32>
      %81 = vector.shape_cast %78 : vector<1x32xf32> to vector<1x1x32xf32>
      tpu.vector_store %arg8[%c0_47, %c0_48, %c0_49], %81 {strides = array<i32>} : memref<1x1x32xf32, #tpu.memory_space<vmem>>, vector<1x1x32xf32>,
    } else {
    }
    %c0_36 = arith.constant 0 : index
    %c0_37 = arith.constant 0 : index
    %c0_38 = arith.constant 0 : index
    %64 = vector.load %arg7[%c0_36, %c0_37, %c0_38] : memref<1x8x128xf32, #tpu.memory_space<vmem>>, vector<1x8x32xf32>
    %65 = vector.shape_cast %64 : vector<1x8x32xf32> to vector<8x32xf32>
    %66 = vector.shape_cast %4 : vector<8x32xf32> to vector<1x8x32xf32>
    tpu.vector_store %arg7[%c0_36, %c0_37, %c0_38], %66 {strides = array<i32>} : memref<1x8x128xf32, #tpu.memory_space<vmem>>, vector<1x8x32xf32>,
    %c0_39 = arith.constant 0 : index
    %c0_40 = arith.constant 0 : index
    %c32 = arith.constant 32 : index
    %67 = vector.load %arg7[%c0_39, %c0_40, %c32] : memref<1x8x128xf32, #tpu.memory_space<vmem>>, vector<1x8x32xf32>
    %68 = vector.shape_cast %67 : vector<1x8x32xf32> to vector<8x32xf32>
    %69 = vector.shape_cast %34 : vector<8x32xf32> to vector<1x8x32xf32>
    tpu.vector_store %arg7[%c0_39, %c0_40, %c32], %69 {strides = array<i32>} : memref<1x8x128xf32, #tpu.memory_space<vmem>>, vector<1x8x32xf32>,
    %70 = arith.mulf %4, %34 : vector<8x32xf32>
    %c0_41 = arith.constant 0 : index
    %c0_42 = arith.constant 0 : index
    %c64 = arith.constant 64 : index
    %71 = vector.load %arg7[%c0_41, %c0_42, %c64] : memref<1x8x128xf32, #tpu.memory_space<vmem>>, vector<1x8x32xf32>
    %72 = vector.shape_cast %71 : vector<1x8x32xf32> to vector<8x32xf32>
    %73 = vector.shape_cast %70 : vector<8x32xf32> to vector<1x8x32xf32>
    tpu.vector_store %arg7[%c0_41, %c0_42, %c64], %73 {strides = array<i32>} : memref<1x8x128xf32, #tpu.memory_space<vmem>>, vector<1x8x32xf32>,
    return
  }
  func.func @transform_0(%arg0: i32, %arg1: i32) -> (i32, i32, i32) {
    %c0_i32 = arith.constant 0 : i32
    %c0_i32_0 = arith.constant 0 : i32
    return %arg0, %arg1, %c0_i32 : i32, i32, i32
  }
  func.func @transform_1(%arg0: i32, %arg1: i32) -> (i32, i32, i32) {
    %c0_i32 = arith.constant 0 : i32
    %c0_i32_0 = arith.constant 0 : i32
    %c0_i32_1 = arith.constant 0 : i32
    return %arg0, %c0_i32, %c0_i32_0 : i32, i32, i32
  }
  func.func @transform_2(%arg0: i32, %arg1: i32) -> (i32, i32, i32) {
    %c0_i32 = arith.constant 0 : i32
    %c0_i32_0 = arith.constant 0 : i32
    %c0_i32_1 = arith.constant 0 : i32
    return %arg0, %c0_i32, %c0_i32_0 : i32, i32, i32
  }
  func.func @transform_3(%arg0: i32, %arg1: i32) -> (i32, i32) {
    %c0_i32 = arith.constant 0 : i32
    %c0_i32_0 = arith.constant 0 : i32
    %c0_i32_1 = arith.constant 0 : i32
    return %c0_i32, %c0_i32_0 : i32, i32
  }
  func.func @transform_4(%arg0: i32, %arg1: i32) -> (i32, i32) {
    %c0_i32 = arith.constant 0 : i32
    %c0_i32_0 = arith.constant 0 : i32
    %c0_i32_1 = arith.constant 0 : i32
    return %c0_i32, %c0_i32_0 : i32, i32
  }
  func.func @transform_5(%arg0: i32, %arg1: i32) -> (i32, i32, i32) {
    %c0_i32 = arith.constant 0 : i32
    %c0_i32_0 = arith.constant 0 : i32
    return %arg0, %arg1, %c0_i32 : i32, i32, i32
  }
  func.func @transform_6(%arg0: i32, %arg1: i32) -> (i32, i32, i32) {
    %c0_i32 = arith.constant 0 : i32
    %c0_i32_0 = arith.constant 0 : i32
    %c0_i32_1 = arith.constant 0 : i32
    return %arg0, %c0_i32, %c0_i32_0 : i32, i32, i32
  }
}

</mosaic_0001>

<llo_original>
// kernel: bi_attention.1
$region0: #{bi_attention.1}
  #allocation0 [shape = 'u32[]', space=smem, size = 0x4, offset = 0x4, fixed_abs, tag = 'smem constant byte address 0x4 - core index']
  #allocation1 [shape = 'u32[144,128]{1,0:T(1,128)}', space=vmem, size = 0x12000, scoped, tag = 'internal scratch']
  #allocation2 [shape = 'f32[1,1]{1,0:T(1,128)}', space=vmem, size = 0x200, scoped, tag = 'scratch operand']
  #allocation3 [shape = 'f32[1,1]{1,0:T(1,128)}', space=vmem, size = 0x200, scoped, tag = 'scratch operand']
  #allocation4 [shape = 'f32[1,32]{1,0:T(1,128)}', space=vmem, size = 0x200, scoped, tag = 'scratch operand']
  %s0 = inlined_call_operand.vmem [shape: f32[2,8,32], index: 0, kind: input, shape index: {}]
  %s1 = inlined_call_operand.vmem [shape: bf16[2,16,32], index: 1, kind: input, shape index: {}]
  %s2 = inlined_call_operand.vmem [shape: f32[2,1,16], index: 2, kind: input, shape index: {}]
  %s3 = inlined_call_operand.vmem [shape: f32[1,32], index: 3, kind: input, shape index: {}]
  %s4 = inlined_call_operand.vmem [shape: f32[1,32], index: 4, kind: input, shape index: {}]
  %s5 = inlined_call_operand.vmem [shape: f32[2,8,128], index: 5, kind: output, shape index: {0}]
  %s6 = inlined_call_operand.vmem [shape: f32[2,1,32], index: 6, kind: output, shape index: {1}]
  %7 = xla_tuple %s5, %s6
  %s8 = sld [smem:[#allocation0]]
  $region69: #{bi_attention.1} parent=0
    _
  %s10 = ssub.s32 1, %s8
  %s11 = scalar_select 0, %s10, %s8
  loop: start=0, step=1, limit=4
  $region2: #{bi_attention.1} parent=0 // loop_pre_header
    _
  $region3: #{bi_attention.1} parent=0 // loop_header
    %s13 = sphi 0, %s17
    %p14 = scmp.ge.s32.totalorder %s13, 4
    %s20 = sphi 0, %s32
    %s21 = sphi 0, %s28
    %s22 = sphi 0, %s20
    %s23 = sphi 0, %s21
    %s24 = sphi 0, %s22
    %s25 = sphi 0, %s23
    %s37 = sphi 0, %s39
    %s40 = sphi 0, %s37
    %s41 = sphi 0, %s40
    %s57 = sphi 0, %s41
    %s63 = sphi 0, %s65
    %s66 = sphi 0, %s63
    %s67 = sphi 0, %s66
    %s83 = sphi 0, %s67
    %s89 = sphi 0, %s91
    %s92 = sphi 0, %s89
    %s93 = sphi 0, %s92
    %s109 = sphi 0, %s93
    %s113 = sphi 0, %s113
    %s115 = sphi 0, %s113
    %s116 = sphi 0, %s115
    %s130 = sphi 0, %s116
    %s134 = sphi 0, %s134
    %s136 = sphi 0, %s134
    %s137 = sphi 0, %s136
    %s151 = sphi 0, %s137
    %s159 = sphi 0, %s161
    %s162 = sphi 0, %s159
    %s163 = sphi 0, %s162
    %s179 = sphi 0, %s163
    %s185 = sphi 0, %s187
    %s188 = sphi 0, %s185
    %s189 = sphi 0, %s188
    %s205 = sphi 0, %s189
  $region4: #{bi_attention.1} parent=0 // loop_header_branch
    %16 = sbr.rel (%p14) target = $region8
  $region5: #{bi_attention.1} parent=0 // loop_body
    %s18 = ssub.s32 %s13, 1
    %s19 = ssub.s32 %s13, 2
    %s26 = sadd.s32 1, %s21
    %p27 = scmp.ge.s32.totalorder %s26, 1
    %s28 = scalar_select %p27, 0, %s26
    %s29 = sadd.s32 1, %s20
    %s30 = scalar_select %p27, %s29, %s20
    %p31 = scmp.ge.s32.totalorder %s30, 2
    %s32 = scalar_select %p31, 0, %s30
    %s33 = ssub.s32 %s20, %s32
    %s34 = ssub.s32 %s21, %s28
    %s35 = sor.u32 %s33, %s34
    %p36 = scmp.eq.s32.totalorder %s35, 0
    %s38 = sadd.s32 %s37, 1
    %s39 = scalar_select %p36, %s37, %s38
    %p42 = pneg %p36
    %p43 = scmp.eq.s32.totalorder %s13, 1
    %p44 = por %p42, %p43
    %p45 = scmp.ne.s32.totalorder %s37, %s40
    %p46 = scmp.eq.s32.totalorder %s13, 0
    %p47 = por %p45, %p46
    %p48 = scmp.ne.s32.totalorder %s37, %s40
    %p49 = scmp.eq.s32.totalorder %s18, 1
    %p50 = por %p48, %p49
    %p51 = scmp.ne.s32.totalorder %s40, %s41
    %p52 = scmp.eq.s32.totalorder %s18, 0
    %p53 = por %p51, %p52
    %p54 = scmp.ne.s32.totalorder %s40, %s41
    %p55 = scmp.eq.s32.totalorder %s19, 1
    %p56 = por %p54, %p55
    %p58 = scmp.ne.s32.totalorder %s41, %s57
    %p59 = scmp.eq.s32.totalorder %s19, 0
    %p60 = por %p58, %p59
    %s61 = ssub.s32 %s20, %s32
    %p62 = scmp.eq.s32.totalorder %s61, 0
    %s64 = sadd.s32 %s63, 1
    %s65 = scalar_select %p62, %s63, %s64
    %p68 = pneg %p62
    %p69 = scmp.eq.s32.totalorder %s13, 1
    %p70 = por %p68, %p69
    %p71 = scmp.ne.s32.totalorder %s63, %s66
    %p72 = scmp.eq.s32.totalorder %s13, 0
    %p73 = por %p71, %p72
    %p74 = scmp.ne.s32.totalorder %s63, %s66
    %p75 = scmp.eq.s32.totalorder %s18, 1
    %p76 = por %p74, %p75
    %p77 = scmp.ne.s32.totalorder %s66, %s67
    %p78 = scmp.eq.s32.totalorder %s18, 0
    %p79 = por %p77, %p78
    %p80 = scmp.ne.s32.totalorder %s66, %s67
    %p81 = scmp.eq.s32.totalorder %s19, 1
    %p82 = por %p80, %p81
    %p84 = scmp.ne.s32.totalorder %s67, %s83
    %p85 = scmp.eq.s32.totalorder %s19, 0
    %p86 = por %p84, %p85
    %s87 = ssub.s32 %s20, %s32
    %p88 = scmp.eq.s32.totalorder %s87, 0
    %s90 = sadd.s32 %s89, 1
    %s91 = scalar_select %p88, %s89, %s90
    %p94 = pneg %p88
    %p95 = scmp.eq.s32.totalorder %s13, 1
    %p96 = por %p94, %p95
    %p97 = scmp.ne.s32.totalorder %s89, %s92
    %p98 = scmp.eq.s32.totalorder %s13, 0
    %p99 = por %p97, %p98
    %p100 = scmp.ne.s32.totalorder %s89, %s92
    %p101 = scmp.eq.s32.totalorder %s18, 1
    %p102 = por %p100, %p101
    %p103 = scmp.ne.s32.totalorder %s92, %s93
    %p104 = scmp.eq.s32.totalorder %s18, 0
    %p105 = por %p103, %p104
    %p106 = scmp.ne.s32.totalorder %s92, %s93
    %p107 = scmp.eq.s32.totalorder %s19, 1
    %p108 = por %p106, %p107
    %p110 = scmp.ne.s32.totalorder %s93, %s109
    %p111 = scmp.eq.s32.totalorder %s19, 0
    %p112 = por %p110, %p111
    %s114 = sadd.s32 %s113, 1
    %p117 = scmp.eq.s32.totalorder %s13, 1
    %p118 = scmp.ne.s32.totalorder %s113, %s115
    %p119 = scmp.eq.s32.totalorder %s13, 0
    %p120 = por %p118, %p119
    %p121 = scmp.ne.s32.totalorder %s113, %s115
    %p122 = scmp.eq.s32.totalorder %s18, 1
    %p123 = por %p121, %p122
    %p124 = scmp.ne.s32.totalorder %s115, %s116
    %p125 = scmp.eq.s32.totalorder %s18, 0
    %p126 = por %p124, %p125
    %p127 = scmp.ne.s32.totalorder %s115, %s116
    %p128 = scmp.eq.s32.totalorder %s19, 1
    %p129 = por %p127, %p128
    %p131 = scmp.ne.s32.totalorder %s116, %s130
    %p132 = scmp.eq.s32.totalorder %s19, 0
    %p133 = por %p131, %p132
    %s135 = sadd.s32 %s134, 1
    %p138 = scmp.eq.s32.totalorder %s13, 1
    %p139 = scmp.ne.s32.totalorder %s134, %s136
    %p140 = scmp.eq.s32.totalorder %s13, 0
    %p141 = por %p139, %p140
    %p142 = scmp.ne.s32.totalorder %s134, %s136
    %p143 = scmp.eq.s32.totalorder %s18, 1
    %p144 = por %p142, %p143
    %p145 = scmp.ne.s32.totalorder %s136, %s137
    %p146 = scmp.eq.s32.totalorder %s18, 0
    %p147 = por %p145, %p146
    %p148 = scmp.ne.s32.totalorder %s136, %s137
    %p149 = scmp.eq.s32.totalorder %s19, 1
    %p150 = por %p148, %p149
    %p152 = scmp.ne.s32.totalorder %s137, %s151
    %p153 = scmp.eq.s32.totalorder %s19, 0
    %p154 = por %p152, %p153
    %s155 = ssub.s32 %s20, %s32
    %s156 = ssub.s32 %s21, %s28
    %s157 = sor.u32 %s155, %s156
    %p158 = scmp.eq.s32.totalorder %s157, 0
    %s160 = sadd.s32 %s159, 1
    %s161 = scalar_select %p158, %s159, %s160
    %p164 = pneg %p158
    %p165 = scmp.eq.s32.totalorder %s13, 1
    %p166 = por %p164, %p165
    %p167 = scmp.ne.s32.totalorder %s159, %s162
    %p168 = scmp.eq.s32.totalorder %s13, 0
    %p169 = por %p167, %p168
    %p170 = scmp.ne.s32.totalorder %s159, %s162
    %p171 = scmp.eq.s32.totalorder %s18, 1
    %p172 = por %p170, %p171
    %p173 = scmp.ne.s32.totalorder %s162, %s163
    %p174 = scmp.eq.s32.totalorder %s18, 0
    %p175 = por %p173, %p174
    %p176 = scmp.ne.s32.totalorder %s162, %s163
    %p177 = scmp.eq.s32.totalorder %s19, 1
    %p178 = por %p176, %p177
    %p180 = scmp.ne.s32.totalorder %s163, %s179
    %p181 = scmp.eq.s32.totalorder %s19, 0
    %p182 = por %p180, %p181
    %s183 = ssub.s32 %s20, %s32
    %p184 = scmp.eq.s32.totalorder %s183, 0
    %s186 = sadd.s32 %s185, 1
    %s187 = scalar_select %p184, %s185, %s186
    %p190 = pneg %p184
    %p191 = scmp.eq.s32.totalorder %s13, 1
    %p192 = por %p190, %p191
    %p193 = scmp.ne.s32.totalorder %s185, %s188
    %p194 = scmp.eq.s32.totalorder %s13, 0
    %p195 = por %p193, %p194
    %p196 = scmp.ne.s32.totalorder %s185, %s188
    %p197 = scmp.eq.s32.totalorder %s18, 1
    %p198 = por %p196, %p197
    %p199 = scmp.ne.s32.totalorder %s188, %s189
    %p200 = scmp.eq.s32.totalorder %s18, 0
    %p201 = por %p199, %p200
    %p202 = scmp.ne.s32.totalorder %s188, %s189
    %p203 = scmp.eq.s32.totalorder %s19, 1
    %p204 = por %p202, %p203
    %p206 = scmp.ne.s32.totalorder %s189, %s205
    %p207 = scmp.eq.s32.totalorder %s19, 0
    %p208 = por %p206, %p207
    %p209 = scmp.le.s32.totalorder 1, %s13
    %p210 = scmp.lt.s32.totalorder %s13, 3
    %p211 = pnand %p209, %p210
    %p212 = pneg %p211
    // Predicated region
    $region9: #{bi_attention.1} parent=5 // pred_check
      _
    $region10: #{bi_attention.1} parent=5 // pred_check_branch
      %214 = sbr.rel (%p211) target = $region12
    $region11: #{bi_attention.1} parent=5 // pred_region
      %s215 = ssub.s32 %s13, 1
      // Predicated region
      $region13: #{bi_attention.1} parent=11 // pred_check
        %p216 = pneg %p126
      $region14: #{bi_attention.1} parent=11 // pred_check_branch
        %218 = sbr.rel (%p216) target = $region16
      $region15: #{bi_attention.1} parent=11 // pred_region
        _
      $region16: #{bi_attention.1} parent=11 // pred_fallthru
        _
      // Predicated region
      $region17: #{bi_attention.1} parent=11 // pred_check
        %p219 = pneg %p147
      $region18: #{bi_attention.1} parent=11 // pred_check_branch
        %221 = sbr.rel (%p219) target = $region20
      $region19: #{bi_attention.1} parent=11 // pred_region
        _
      $region20: #{bi_attention.1} parent=11 // pred_fallthru
        _
    $region12: #{bi_attention.1} parent=5 // pred_fallthru
      _
    %p222 = scmp.lt.s32.totalorder %s13, 2
    // Predicated region
    $region21: #{bi_attention.1} parent=5 // pred_check
      %p223 = pneg %p222
    $region22: #{bi_attention.1} parent=5 // pred_check_branch
      %225 = sbr.rel (%p223) target = $region24
    $region23: #{bi_attention.1} parent=5 // pred_region
      // Predicated region
      $region25: #{bi_attention.1} parent=23 // pred_check
        %p226 = pneg %p47
      $region26: #{bi_attention.1} parent=23 // pred_check_branch
        %228 = sbr.rel (%p226) target = $region28
      $region27: #{bi_attention.1} parent=23 // pred_region
        %p229 = scmp.lt.s32.totalorder %s20, 1
        %s230 = scalar_select %p229, %s20, 1
        %p231 = scmp.lt.s32.totalorder %s21, 0
        %s232 = scalar_select %p231, %s21, 0
        %s233 = sadd.s32 %s232, %s230
        %s234 = smul.addr %s233, 8
        %s235 = scalar_lea.vmem %s0, %s234
      $region28: #{bi_attention.1} parent=23 // pred_fallthru
        _
      // Predicated region
      $region29: #{bi_attention.1} parent=23 // pred_check
        %p236 = pneg %p73
      $region30: #{bi_attention.1} parent=23 // pred_check_branch
        %238 = sbr.rel (%p236) target = $region32
      $region31: #{bi_attention.1} parent=23 // pred_region
        %p239 = scmp.lt.s32.totalorder %s20, 1
        %s240 = scalar_select %p239, %s20, 1
        %s241 = smul.addr %s240, 2
        %s242 = smul.addr %s241, 4
        %s243 = scalar_lea.vmem %s1, %s242
      $region32: #{bi_attention.1} parent=23 // pred_fallthru
        _
      // Predicated region
      $region33: #{bi_attention.1} parent=23 // pred_check
        %p244 = pneg %p99
      $region34: #{bi_attention.1} parent=23 // pred_check_branch
        %246 = sbr.rel (%p244) target = $region36
      $region35: #{bi_attention.1} parent=23 // pred_region
        %p247 = scmp.lt.s32.totalorder %s20, 1
        %s248 = scalar_select %p247, %s20, 1
        %s249 = scalar_lea.vmem %s2, %s248
      $region36: #{bi_attention.1} parent=23 // pred_fallthru
        _
    $region24: #{bi_attention.1} parent=5 // pred_fallthru
      _
    %p250 = scmp.le.s32.totalorder 1, %s13
    %p251 = scmp.lt.s32.totalorder %s13, 3
    %p252 = pnand %p250, %p251
    %p253 = pneg %p252
    // Predicated region
    $region37: #{bi_attention.1} parent=5 // pred_check
      _
    $region38: #{bi_attention.1} parent=5 // pred_check_branch
      %255 = sbr.rel (%p252) target = $region40
    $region39: #{bi_attention.1} parent=5 // pred_region
      %s256 = ssub.s32 %s13, 1
      %p257 = scmp.lt.s32.totalorder %s22, 1
      %s258 = scalar_select %p257, %s22, 1
      %p259 = scmp.lt.s32.totalorder %s23, 0
      %s260 = scalar_select %p259, %s23, 0
      %s261 = sadd.s32 %s260, %s258
      %s262 = smul.addr %s261, 8
      %s263 = scalar_lea.vmem %s0, %s262
      %p264 = pneg %p53
      %p265 = pneg %p50
      %p266 = scmp.lt.s32.totalorder %s22, 1
      %s267 = scalar_select %p266, %s22, 1
      %s268 = smul.addr %s267, 2
      %s269 = smul.addr %s268, 4
      %s270 = scalar_lea.vmem %s1, %s269
      %p271 = pneg %p79
      %p272 = pneg %p76
      %p273 = scmp.lt.s32.totalorder %s22, 1
      %s274 = scalar_select %p273, %s22, 1
      %s275 = scalar_lea.vmem %s2, %s274
      %p276 = pneg %p105
      %p277 = pneg %p102
      %p278 = pneg %p126
      %p279 = pneg %p123
      %p280 = pneg %p147
      %p281 = pneg %p144
      %p282 = pneg %p175
      %p283 = pneg %p172
      %p284 = scmp.lt.s32.totalorder %s22, 1
      %s285 = scalar_select %p284, %s22, 1
      %p286 = scmp.lt.s32.totalorder %s23, 0
      %s287 = scalar_select %p286, %s23, 0
      %s288 = sadd.s32 %s287, %s285
      %s289 = smul.addr %s288, 8
      %s290 = scalar_lea.vmem %s5, %s289
      %p291 = pneg %p201
      %p292 = pneg %p198
      %p293 = scmp.lt.s32.totalorder %s22, 1
      %s294 = scalar_select %p293, %s22, 1
      %s295 = scalar_lea.vmem %s6, %s294
      %p296 = scmp.lt.s32.totalorder %s22, 1
      %s297 = scalar_select %p296, %s22, 1
      %p298 = scmp.lt.s32.totalorder %s23, 0
      %s299 = scalar_select %p298, %s23, 0
      %s300 = sadd.s32 %s299, %s297
      %s301 = smul.addr %s300, 8
      %s302 = scalar_lea.vmem %s0, %s301
      %p303 = scmp.lt.s32.totalorder %s22, 1
      %s304 = scalar_select %p303, %s22, 1
      %s305 = smul.addr %s304, 2
      %s306 = smul.addr %s305, 4
      %s307 = scalar_lea.vmem %s1, %s306
      %p308 = scmp.lt.s32.totalorder %s22, 1
      %s309 = scalar_select %p308, %s22, 1
      %s310 = scalar_lea.vmem %s2, %s309
      %p311 = scmp.lt.s32.totalorder %s22, 1
      %s312 = scalar_select %p311, %s22, 1
      %p313 = scmp.lt.s32.totalorder %s23, 0
      %s314 = scalar_select %p313, %s23, 0
      %s315 = sadd.s32 %s314, %s312
      %s316 = smul.addr %s315, 8
      %s317 = scalar_lea.vmem %s5, %s316
      %p318 = scmp.lt.s32.totalorder %s22, 1
      %s319 = scalar_select %p318, %s22, 1
      %s320 = scalar_lea.vmem %s6, %s319
      %p322 = scmp.eq.s32.totalorder %s23, 0
      // Predicated region
      $region41: #{bi_attention.1} parent=39 // pred_check
        %p323 = pneg %p322
      $region42: #{bi_attention.1} parent=39 // pred_check_branch
        %325 = sbr.rel (%p323) target = $region44
      $region43: #{bi_attention.1} parent=39 // pred_region
        %vm326 = vcmask 0
        %327 = vst.msk [vmem:[#allocation2] sm:$0x1] %vm326, -1e+37
        %328 = vst.msk [vmem:[#allocation3] sm:$0x1] %vm326, 0.0
        %vm329 = vcmask 253952
        %330 = vst.msk [vmem:[#allocation4] sm:$0x1] %vm329, 0.0
      $region44: #{bi_attention.1} parent=39 // pred_fallthru
        _
      %v331 = vld [vmem:[%s302] sm:$0xff]
      %v332 = vld [vmem:[%s307] sm:$0xf]
      %v333 = vld [vmem:[%s307 + $0x4] sm:$0xf]
      %v334 = vld [vmem:[%s3] sm:$0x1]
      %v336 = vlaneseq
      %v337 = vshrl.u32 %v336, 7
      %v338 = vsub.s32 0, %v337
      %v339 = vrot.slane %v334, %v338
      %v341 = vmul.f32 %v331, %v339
      %vm342 = vcmask 261120
      %v343 = vsel %vm342, %v341, 0.0
      %344 = vadd.xlane.f32.xlu0 %v343
      %v345 = vpop.xlane.xlu0 %344
      %v346 = vld [vmem:[%s4] sm:$0x1]
      %v348 = vlaneseq
      %v349 = vshrl.u32 %v348, 7
      %v350 = vsub.s32 0, %v349
      %v351 = vrot.slane %v346, %v350
      %v353 = vmul.f32 %v331, %v351
      %v354 = vpack.c.bf16 %v353, %v353
      %v357 = vunpack.c.l.b16 %v332
      %v358 = vunpack.c.l.b16 %v333
      %v359 = vpack.c.b16 %v358, %v357
      %v361 = vsel %vm342, %v354, 0
      %v364 = vsel %vm342, %v359, 0
      %366 = vmatprep.subr.bf16.mxu0 0
      %367 = vmatpush1.bf16.xpose.msra.mxu0 0
      %368 = vmatprep.subr.bf16.mxu0 0
      %369 = vmatpush1.bf16.xpose.msra.mxu0 0
      %370 = vmatprep.subr.bf16.mxu0 0
      %371 = vmatpush1.bf16.xpose.msra.mxu0 0
      %372 = vmatprep.subr.bf16.mxu0 0
      %373 = vmatpush1.bf16.xpose.msra.mxu0 0
      %374 = vmatprep.subr.bf16.mxu0 0
      %375 = vmatpush1.bf16.xpose.msra.mxu0 0
      %376 = vmatprep.subr.bf16.mxu0 0
      %377 = vmatpush1.bf16.xpose.msra.mxu0 0
      %378 = vmatprep.subr.bf16.mxu0 0
      %379 = vmatpush1.bf16.xpose.msra.mxu0 0
      %380 = vmatprep.subr.bf16.mxu0 0
      %381 = vmatpush1.bf16.xpose.msra.mxu0 %v364
      %382 = vmatprep.subr.bf16.mxu0 0
      %383 = vmatpush2.bf16.xpose.msra.mxu0 0
      %384 = vmatprep.subr.bf16.mxu0 0
      %385 = vmatpush2.bf16.xpose.msra.mxu0 0
      %386 = vmatprep.subr.bf16.mxu0 0
      %387 = vmatpush2.bf16.xpose.msra.mxu0 0
      %388 = vmatprep.subr.bf16.mxu0 0
      %389 = vmatpush2.bf16.xpose.msra.mxu0 0
      %390 = vmatprep.subr.bf16.mxu0 0
      %391 = vmatpush2.bf16.xpose.msra.mxu0 0
      %392 = vmatprep.subr.bf16.mxu0 0
      %393 = vmatpush2.bf16.xpose.msra.mxu0 0
      %394 = vmatprep.subr.bf16.mxu0 0
      %395 = vmatpush2.bf16.xpose.msra.mxu0 0
      %396 = vmatprep.subr.bf16.mxu0 0
      %397 = vmatpush2.bf16.xpose.msra.mxu0 0
      %398 = vmatprep.mubr.bf16.mxu0 0
      %399 = vmatmul.mubr.bf16.gmra.mxu0 %v361
      %v400 = vpop.f32.mrf.mxu0
      %v401 = vadd.f32 %v345, %v400
      %v402 = vpop.f32.mrf.mxu0
      %v403 = vpop.f32.mrf.mxu0
      %v404 = vpop.f32.mrf.mxu0
      %405 = vdwg.mxu0
      %v406 = vld [vmem:[%s310] sm:$0x1]
      %v408 = vlaneseq
      %v409 = vshrl.u32 %v408, 7
      %v410 = vsub.s32 0, %v409
      %v411 = vrot.slane %v406, %v410
      %v413 = vadd.f32 %v401, %v411
      %vm414 = vcmask 130048
      %v415 = vsel %vm414, %v413, -inf
      %416 = vmax.xlane.f32.xlu0 %v415
      %v417 = vpop.xlane.xlu0 %416
      %v418 = vsub.f32 %v413, %v417
      %v419 = vmul.f32 %v418, 1.442695
      %v420 = vpow.pop %v419
      %v421 = vsel %vm414, %v420, 0.0
      %422 = vadd.xlane.f32.xlu0 %v421
      %v423 = vpop.xlane.xlu0 %422
      %v424 = vpack.c.bf16 %v420, %v420
      %v427 = vsel %vm414, %v424, 0
      %429 = vmatprep.subr.bf16.mxu0 0
      %430 = vmatpush1.bf16.msra.mxu0 0
      %431 = vmatprep.subr.bf16.mxu0 0
      %432 = vmatpush1.bf16.msra.mxu0 0
      %433 = vmatprep.subr.bf16.mxu0 0
      %434 = vmatpush1.bf16.msra.mxu0 0
      %435 = vmatprep.subr.bf16.mxu0 0
      %436 = vmatpush1.bf16.msra.mxu0 0
      %437 = vmatprep.subr.bf16.mxu0 0
      %438 = vmatpush1.bf16.msra.mxu0 0
      %439 = vmatprep.subr.bf16.mxu0 0
      %440 = vmatpush1.bf16.msra.mxu0 0
      %441 = vmatprep.subr.bf16.mxu0 0
      %442 = vmatpush1.bf16.msra.mxu0 0
      %443 = vmatprep.subr.bf16.mxu0 0
      %444 = vmatpush1.bf16.msra.mxu0 %v359
      %445 = vmatprep.subr.bf16.mxu0 0
      %446 = vmatpush2.bf16.msra.mxu0 0
      %447 = vmatprep.subr.bf16.mxu0 0
      %448 = vmatpush2.bf16.msra.mxu0 0
      %449 = vmatprep.subr.bf16.mxu0 0
      %450 = vmatpush2.bf16.msra.mxu0 0
      %451 = vmatprep.subr.bf16.mxu0 0
      %452 = vmatpush2.bf16.msra.mxu0 0
      %453 = vmatprep.subr.bf16.mxu0 0
      %454 = vmatpush2.bf16.msra.mxu0 0
      %455 = vmatprep.subr.bf16.mxu0 0
      %456 = vmatpush2.bf16.msra.mxu0 0
      %457 = vmatprep.subr.bf16.mxu0 0
      %458 = vmatpush2.bf16.msra.mxu0 0
      %459 = vmatprep.subr.bf16.mxu0 0
      %460 = vmatpush2.bf16.msra.mxu0 0
      %461 = vmatprep.mubr.bf16.mxu0 0
      %462 = vmatmul.mubr.bf16.gmra.mxu0 %v427
      %v463 = vpop.f32.mrf.mxu0
      %v464 = vadd.f32 0.0, %v463
      %v465 = vpop.f32.mrf.mxu0
      %v466 = vpop.f32.mrf.mxu0
      %v467 = vpop.f32.mrf.mxu0
      %468 = vdwg.mxu0
      %v469 = vrcp.pop %v423
      %v470 = vmul.f32 %v464, %v469
      %v471 = vld [vmem:[#allocation2] sm:$0x1]
      %v472 = vrot.slane %v417, 4
      %v473 = vmax.f32 %v417, %v472
      %v474 = vrot.slane %v473, 2
      %v475 = vmax.f32 %v473, %v474
      %v476 = vrot.slane %v475, 1
      %v477 = vmax.f32 %v475, %v476
      %v478 = vmax.f32 %v471, %v477
      %v479 = vsub.f32 %v471, %v478
      %v480 = vmul.f32 %v479, 1.442695
      %v481 = vpow.pop %v480
      %v483 = vlaneseq
      %v484 = vshrl.u32 %v483, 7
      %v485 = vsub.s32 0, %v484
      %v486 = vrot.slane %v478, %v485
      %v488 = vsub.f32 %v417, %v486
      %v489 = vmul.f32 %v488, 1.442695
      %v490 = vpow.pop %v489
      %v491 = vld [vmem:[#allocation3] sm:$0x1]
      %v492 = vmul.f32 %v481, %v491
      %vm493 = vcmask 7168
      %v494 = vsel %vm493, %v490, 0.0
      %v495 = vrot.slane %v494, 4
      %v496 = vadd.f32 %v494, %v495
      %v497 = vrot.slane %v496, 2
      %v498 = vadd.f32 %v496, %v497
      %v499 = vrot.slane %v498, 1
      %v500 = vadd.f32 %v498, %v499
      %v501 = vadd.f32 %v492, %v500
      %vm502 = vcmask 0
      %503 = vst.msk [vmem:[#allocation3] sm:$0x1] %vm502, %v501
      %v504 = vld [vmem:[#allocation4] sm:$0x1]
      %506 = vset.pattern.permute.xlu0 0
      %507 = vperm.xlu0 %506, %v481
      %v508 = vpop.permute.xlu0 %507
      %v510 = vlaneseq
      %v511 = vshrl.u32 %v510, 7
      %v512 = vsub.s32 0, %v511
      %v513 = vrot.slane %v508, %v512
      %v514 = vmul.f32 %v513, %v504
      %516 = vset.pattern.permute.xlu0 0
      %517 = vperm.xlu0 %516, %v490
      %v518 = vpop.permute.xlu0 %517
      %v520 = vmul.f32 %v518, %v331
      %v521 = vsel %vm342, %v520, 0.0
      %v522 = vrot.slane %v521, 4
      %v523 = vadd.f32 %v521, %v522
      %v524 = vrot.slane %v523, 2
      %v525 = vadd.f32 %v523, %v524
      %v526 = vrot.slane %v525, 1
      %v527 = vadd.f32 %v525, %v526
      %v528 = vadd.f32 %v514, %v527
      %vm529 = vcmask 253952
      %530 = vst.msk [vmem:[#allocation4] sm:$0x1] %vm529, %v528
      %531 = vst.msk [vmem:[#allocation2] sm:$0x1] %vm502, %v478
      // Predicated region
      $region45: #{bi_attention.1} parent=39 // pred_check
        %p532 = pneg %p322
      $region46: #{bi_attention.1} parent=39 // pred_check_branch
        %534 = sbr.rel (%p532) target = $region48
      $region47: #{bi_attention.1} parent=39 // pred_region
        %v535 = vld [vmem:[#allocation4] sm:$0x1]
        %v536 = vld [vmem:[#allocation3] sm:$0x1]
        %v537 = vrcp.pop %v536
        %539 = vset.pattern.permute.xlu0 0
        %540 = vperm.xlu0 %539, %v537
        %v541 = vpop.permute.xlu0 %540
        %v543 = vlaneseq
        %v544 = vshrl.u32 %v543, 7
        %v545 = vsub.s32 0, %v544
        %v546 = vrot.slane %v541, %v545
        %v547 = vmul.f32 %v535, %v546
        %548 = vst.msk [vmem:[%s320] sm:$0x1] %vm529, %v547
      $region48: #{bi_attention.1} parent=39 // pred_fallthru
        _
      %549 = vst.msk [vmem:[%s317] sm:$0xff] %vm342, %v331
      %551 = vrot.lane.b32.xlu0 %v470, 32
      %v552 = vpop.permute.xlu0 %551
      %vm554 = vcmask 523520
      %555 = vst.msk [vmem:[%s317] sm:$0xff] %vm554, %v552
      %v556 = vmul.f32 %v331, %v470
      %558 = vrot.lane.b32.xlu0 %v556, 64
      %v559 = vpop.permute.xlu0 %558
      %vm561 = vcmask 785920
      %562 = vst.msk [vmem:[%s317] sm:$0xff] %vm561, %v559
      %p563 = scmp.lt.s32.totalorder %s22, 1
      %s564 = scalar_select %p563, %s22, 1
      %p565 = scmp.lt.s32.totalorder %s23, 0
      %s566 = scalar_select %p565, %s23, 0
      %s567 = sadd.s32 %s566, %s564
      %s568 = smul.addr %s567, 8
      %s569 = scalar_lea.vmem %s5, %s568
      %p570 = scmp.lt.s32.totalorder %s22, 1
      %s571 = scalar_select %p570, %s22, 1
      %s572 = scalar_lea.vmem %s6, %s571
      // Predicated region
      $region49: #{bi_attention.1} parent=39 // pred_check
        %p573 = pneg %p172
      $region50: #{bi_attention.1} parent=39 // pred_check_branch
        %575 = sbr.rel (%p573) target = $region52
      $region51: #{bi_attention.1} parent=39 // pred_region
        _
      $region52: #{bi_attention.1} parent=39 // pred_fallthru
        _
      // Predicated region
      $region53: #{bi_attention.1} parent=39 // pred_check
        %p576 = pneg %p198
      $region54: #{bi_attention.1} parent=39 // pred_check_branch
        %578 = sbr.rel (%p576) target = $region56
      $region55: #{bi_attention.1} parent=39 // pred_region
        _
      $region56: #{bi_attention.1} parent=39 // pred_fallthru
        _
    $region40: #{bi_attention.1} parent=5 // pred_fallthru
      _
    %p579 = scmp.le.s32.totalorder 2, %s13
    // Predicated region
    $region57: #{bi_attention.1} parent=5 // pred_check
      %p580 = pneg %p579
    $region58: #{bi_attention.1} parent=5 // pred_check_branch
      %582 = sbr.rel (%p580) target = $region60
    $region59: #{bi_attention.1} parent=5 // pred_region
      %s583 = ssub.s32 %s13, 2
      // Predicated region
      $region61: #{bi_attention.1} parent=59 // pred_check
        %p584 = pneg %p178
      $region62: #{bi_attention.1} parent=59 // pred_check_branch
        %586 = sbr.rel (%p584) target = $region64
      $region63: #{bi_attention.1} parent=59 // pred_region
        %p587 = scmp.lt.s32.totalorder %s24, 1
        %s588 = scalar_select %p587, %s24, 1
        %p589 = scmp.lt.s32.totalorder %s25, 0
        %s590 = scalar_select %p589, %s25, 0
        %s591 = sadd.s32 %s590, %s588
        %s592 = smul.addr %s591, 8
        %s593 = scalar_lea.vmem %s5, %s592
      $region64: #{bi_attention.1} parent=59 // pred_fallthru
        _
      // Predicated region
      $region65: #{bi_attention.1} parent=59 // pred_check
        %p594 = pneg %p204
      $region66: #{bi_attention.1} parent=59 // pred_check_branch
        %596 = sbr.rel (%p594) target = $region68
      $region67: #{bi_attention.1} parent=59 // pred_region
        %p597 = scmp.lt.s32.totalorder %s24, 1
        %s598 = scalar_select %p597, %s24, 1
        %s599 = scalar_lea.vmem %s6, %s598
      $region68: #{bi_attention.1} parent=59 // pred_fallthru
        _
    $region60: #{bi_attention.1} parent=5 // pred_fallthru
      _
  $region6: #{bi_attention.1} parent=0 // loop_footer
    %s17 = sadd.s32 1, %s13
  $region7: #{bi_attention.1} parent=0 // loop_footer_branch
    %12 = sbr.rel target = $region3
  $region8: #{bi_attention.1} parent=0 // loop_exit
    _

</llo_original>
